<compile_context>
chip_gen: v7x
topology: tpu7x:2x2x1
jax: 0.10.0
libtpu: 0.0.40
codegen_flags: <defaults>
</compile_context>

<pallas_src>
import functools

import jax
import jax.numpy as jnp
from jax.experimental import pallas as pl
from jax.experimental.pallas import tpu as pltpu


def _cutout_kernel(rows_ref, cols_ref, coords_ref, img_ref, out_ref, *, n_holes):
    """Cutout of n_holes square patches for G images packed along sublanes.

    rows_ref/cols_ref: VMEM int32 (1, CHUNK)        flat-index -> (row, col) tables
    coords_ref:        VMEM int32 (G*C, 4*n_holes)  per block row: [y1, hy, x1, hx]*n
    img_ref/out_ref:   VMEM (G*C, CHUNK)            lane-dense image block
    """
    rows = rows_ref[...]          # (1, CHUNK)  broadcasts along sublanes
    cols = cols_ref[...]          # (1, CHUNK)
    cv = coords_ref[...]          # (G*C, 4*n_holes)

    def hole(n):
        y1 = cv[:, 4 * n + 0:4 * n + 1]   # (G*C, 1) broadcasts along lanes
        hy = cv[:, 4 * n + 1:4 * n + 2]
        x1 = cv[:, 4 * n + 2:4 * n + 3]
        hx = cv[:, 4 * n + 3:4 * n + 4]
        # Unsigned trick: y1 <= r < y1+hy  <=>  (r - y1) as u32 < hy as u32.
        in_y = (rows - y1).astype(jnp.uint32) < hy.astype(jnp.uint32)
        in_x = (cols - x1).astype(jnp.uint32) < hx.astype(jnp.uint32)
        return in_y & in_x

    hole_any = hole(0)
    for n in range(1, n_holes):
        hole_any = hole_any | hole(n)

    # Native-dtype mask then multiply (matches PyTorch `img * mask` exactly,
    # including NaN propagation inside holes). Single full-width store.
    zero = jnp.zeros((), img_ref.dtype)
    one = jnp.ones((), img_ref.dtype)
    mask = jnp.where(hole_any, zero, one)
    out_ref[...] = img_ref[...] * mask


def _pick_group(n, c, hw, itemsize, target_bytes):
    """Images per block: fill >= 8 sublanes, then grow to ~target block size."""
    g = max(1, -(-8 // c))
    g = min(g, n)
    while g * 2 <= n and (g * 2) * c * hw * itemsize <= target_bytes:
        g *= 2
    return g


def _pick_chunk(hw, row_bytes, target_bytes):
    """Lane-chunk of H*W: 128-multiple divisor keeping the block <= target."""
    if row_bytes * hw <= target_bytes or hw % 128 != 0:
        return hw
    best = 128
    c = 128
    while c <= hw and c * row_bytes <= target_bytes:
        if hw % c == 0:
            best = c
        c += 128
    return best


def cutout(imgs, *, n_holes, length, key):
    """Pallas equivalent of Cutout.forward, batched.

    imgs: (N, C, H, W); a single (C, H, W) image is also accepted. Hole centers
    are drawn per-image with jax.random (deterministic analogue of
    np.random.randint); mask construction + multiply run in one pallas_call.
    """
    if imgs.ndim == 3:  # single image, mirroring the PyTorch forward signature
        return cutout(imgs[None], n_holes=n_holes, length=length, key=key)[0]

    N, C, H, W = imgs.shape
    if n_holes == 0:
        return imgs

    # Hole draws + clipped extents (matches np.clip semantics in the module).
    ky, kx = jax.random.split(key)
    ys = jax.random.randint(ky, (N, n_holes), 0, H)
    xs = jax.random.randint(kx, (N, n_holes), 0, W)
    half = length // 2
    y1 = jnp.clip(ys - half, 0, H)
    y2 = jnp.clip(ys + half, 0, H)
    x1 = jnp.clip(xs - half, 0, W)
    x2 = jnp.clip(xs + half, 0, W)
    # [y1, y2-y1, x1, x2-x1] per hole, per image (extents precomputed so the
    # kernel does no scalar arithmetic).
    coords = jnp.stack([y1, y2 - y1, x1, x2 - x1], axis=-1)
    coords = coords.reshape(N, 4 * n_holes).astype(jnp.int32)

    hw = H * W
    itemsize = jnp.dtype(imgs.dtype).itemsize
    target = 1 << 20  # ~1 MiB image block per grid step
    G = _pick_group(N, C, hw, itemsize, target)
    n_pad = -(-N // G) * G
    chunk = _pick_chunk(hw, G * C * itemsize, target)
    nb = n_pad // G
    n_chunks = hw // chunk

    flat = imgs.reshape(N, C, hw)
    if n_pad != N:
        flat = jnp.pad(flat, ((0, n_pad - N), (0, 0), (0, 0)))
        coords = jnp.pad(coords, ((0, n_pad - N), (0, 0)))  # hy=hx=0 -> no hole
    # (NB, G*C, HW): G images packed along sublanes, lane-dense last dim.
    flat = flat.reshape(nb, G * C, hw)
    # Per-block-row coords (each image's coords repeated for its C channels).
    coords_v = jnp.repeat(coords, C, axis=0).reshape(nb, G * C, 4 * n_holes)

    # Flat-index -> (row, col) lookup tables (keeps int div/mod off the VPU).
    flat_idx = jnp.arange(hw, dtype=jnp.int32)
    rows_tab = (flat_idx // W).reshape(1, hw)
    cols_tab = (flat_idx % W).reshape(1, hw)

    block_bytes = G * C * chunk * itemsize
    vmem_limit = int(min(64 << 20, max(16 << 20, 8 * block_bytes)))

    kernel = functools.partial(_cutout_kernel, n_holes=n_holes)
    out = pl.pallas_call(
        kernel,
        out_shape=jax.ShapeDtypeStruct((nb, G * C, hw), imgs.dtype),
        grid=(nb, n_chunks),
        in_specs=[
            pl.BlockSpec((1, chunk), lambda i, j: (0, j)),                     # rows
            pl.BlockSpec((1, chunk), lambda i, j: (0, j)),                     # cols
            pl.BlockSpec((None, G * C, 4 * n_holes), lambda i, j: (i, 0, 0)),  # coords
            pl.BlockSpec((None, G * C, chunk), lambda i, j: (i, 0, j)),        # imgs
        ],
        out_specs=pl.BlockSpec((None, G * C, chunk), lambda i, j: (i, 0, j)),
        compiler_params=pltpu.CompilerParams(
            # Independent steps: pipelined DMA + sharded across TCs on v7x.
            dimension_semantics=("parallel", "parallel"),
            vmem_limit_bytes=vmem_limit,
        ),
        cost_estimate=pl.CostEstimate(
            flops=int(n_pad * C * hw) * (5 * n_holes + 2),
            transcendentals=0,
            bytes_accessed=int(2 * n_pad * C * hw * itemsize + 8 * hw),
        ),
    )(rows_tab, cols_tab, coords_v, flat)

    out = out.reshape(n_pad, C, H, W)
    return out[:N] if n_pad != N else out


if __name__ == "__main__":
    # Module __init__ params (synthetic, deterministic).
    n_holes = 2
    length = 6

    key = jax.random.PRNGKey(0)
    k_img, k_holes = jax.random.split(key)

    # Batch of images of shape (n_channels, height, width).
    N, C, H, W = 2, 4, 16, 16
    imgs = jax.random.normal(k_img, (N, C, H, W), dtype=jnp.float32)

    out = cutout(imgs, n_holes=n_holes, length=length, key=k_holes)
    out = jax.block_until_ready(out)

    # Pure-JAX reference with identical hole draws.
    ky, kx = jax.random.split(k_holes)
    ys = jax.random.randint(ky, (N, n_holes), 0, H)
    xs = jax.random.randint(kx, (N, n_holes), 0, W)
    rows = jnp.arange(H)[:, None]
    cols = jnp.arange(W)[None, :]
    ref_list = []
    for b in range(N):
        mask = jnp.ones((H, W), jnp.float32)
        for n in range(n_holes):
            ry1 = jnp.clip(ys[b, n] - length // 2, 0, H)
            ry2 = jnp.clip(ys[b, n] + length // 2, 0, H)
            rx1 = jnp.clip(xs[b, n] - length // 2, 0, W)
            rx2 = jnp.clip(xs[b, n] + length // 2, 0, W)
            hole = (rows >= ry1) & (rows < ry2) & (cols >= rx1) & (cols < rx2)
            mask = jnp.where(hole, 0.0, mask)
        ref_list.append(imgs[b] * mask[None, :, :])
    ref = jnp.stack(ref_list)

    assert out.shape == imgs.shape
    assert jnp.allclose(out, ref), "Pallas cutout mismatch vs reference"

    print("KERNEL_OK")
</pallas_src>

<mosaic_0001>
module attributes {stable_mosaic.version = 11 : i64} {
  func.func @_cutout_kernel(%arg0: i32, %arg1: i32, %arg2: memref<1x256xi32, #tpu.memory_space<vmem>>, %arg3: memref<1x256xi32, #tpu.memory_space<vmem>>, %arg4: memref<1x8x8xi32, #tpu.memory_space<vmem>>, %arg5: memref<1x8x256xf32, #tpu.memory_space<vmem>>, %arg6: memref<1x8x256xf32, #tpu.memory_space<vmem>>) attributes {dimension_semantics = [#tpu.dimension_semantics<parallel>, #tpu.dimension_semantics<parallel>], iteration_bounds = array<i64: 1, 1>, scalar_prefetch = 0 : i64, scratch_operands = 0 : i64, tpu.core_type = #tpu.core_type<tc>, window_params = [{transform_indices = @transform_0, window_bounds = array<i64: 1, 256>}, {transform_indices = @transform_1, window_bounds = array<i64: 1, 256>}, {transform_indices = @transform_2, window_bounds = array<i64: 1, 8, 8>}, {transform_indices = @transform_3, window_bounds = array<i64: 1, 8, 256>}, {transform_indices = @transform_4, window_bounds = array<i64: 1, 8, 256>}]} {
    %c0 = arith.constant 0 : index
    %c0_0 = arith.constant 0 : index
    %0 = vector.load %arg2[%c0, %c0_0] : memref<1x256xi32, #tpu.memory_space<vmem>>, vector<1x256xi32>
    %c0_1 = arith.constant 0 : index
    %c0_2 = arith.constant 0 : index
    %1 = vector.load %arg3[%c0_1, %c0_2] : memref<1x256xi32, #tpu.memory_space<vmem>>, vector<1x256xi32>
    %c0_3 = arith.constant 0 : index
    %c0_4 = arith.constant 0 : index
    %c0_5 = arith.constant 0 : index
    %2 = vector.load %arg4[%c0_3, %c0_4, %c0_5] : memref<1x8x8xi32, #tpu.memory_space<vmem>>, vector<1x8x8xi32>
    %3 = vector.shape_cast %2 : vector<1x8x8xi32> to vector<8x8xi32>
    %4 = vector.extract_strided_slice %3 {offsets = [0, 0], sizes = [8, 1], strides = [1, 1]} : vector<8x8xi32> to vector<8x1xi32>
    %5 = vector.extract_strided_slice %3 {offsets = [0, 1], sizes = [8, 1], strides = [1, 1]} : vector<8x8xi32> to vector<8x1xi32>
    %6 = vector.extract_strided_slice %3 {offsets = [0, 2], sizes = [8, 1], strides = [1, 1]} : vector<8x8xi32> to vector<8x1xi32>
    %7 = vector.extract_strided_slice %3 {offsets = [0, 3], sizes = [8, 1], strides = [1, 1]} : vector<8x8xi32> to vector<8x1xi32>
    %8 = vector.broadcast %0 : vector<1x256xi32> to vector<8x256xi32>
    %9 = vector.broadcast %4 : vector<8x1xi32> to vector<8x256xi32>
    %10 = arith.subi %8, %9 : vector<8x256xi32>
    %11 = vector.broadcast %5 : vector<8x1xi32> to vector<8x256xi32>
    %12 = arith.cmpi ult, %10, %11 : vector<8x256xi32>
    %13 = vector.broadcast %1 : vector<1x256xi32> to vector<8x256xi32>
    %14 = vector.broadcast %6 : vector<8x1xi32> to vector<8x256xi32>
    %15 = arith.subi %13, %14 : vector<8x256xi32>
    %16 = vector.broadcast %7 : vector<8x1xi32> to vector<8x256xi32>
    %17 = arith.cmpi ult, %15, %16 : vector<8x256xi32>
    %18 = arith.andi %12, %17 : vector<8x256xi1>
    %19 = vector.extract_strided_slice %3 {offsets = [0, 4], sizes = [8, 1], strides = [1, 1]} : vector<8x8xi32> to vector<8x1xi32>
    %20 = vector.extract_strided_slice %3 {offsets = [0, 5], sizes = [8, 1], strides = [1, 1]} : vector<8x8xi32> to vector<8x1xi32>
    %21 = vector.extract_strided_slice %3 {offsets = [0, 6], sizes = [8, 1], strides = [1, 1]} : vector<8x8xi32> to vector<8x1xi32>
    %22 = vector.extract_strided_slice %3 {offsets = [0, 7], sizes = [8, 1], strides = [1, 1]} : vector<8x8xi32> to vector<8x1xi32>
    %23 = vector.broadcast %0 : vector<1x256xi32> to vector<8x256xi32>
    %24 = vector.broadcast %19 : vector<8x1xi32> to vector<8x256xi32>
    %25 = arith.subi %23, %24 : vector<8x256xi32>
    %26 = vector.broadcast %20 : vector<8x1xi32> to vector<8x256xi32>
    %27 = arith.cmpi ult, %25, %26 : vector<8x256xi32>
    %28 = vector.broadcast %1 : vector<1x256xi32> to vector<8x256xi32>
    %29 = vector.broadcast %21 : vector<8x1xi32> to vector<8x256xi32>
    %30 = arith.subi %28, %29 : vector<8x256xi32>
    %31 = vector.broadcast %22 : vector<8x1xi32> to vector<8x256xi32>
    %32 = arith.cmpi ult, %30, %31 : vector<8x256xi32>
    %33 = arith.andi %27, %32 : vector<8x256xi1>
    %34 = arith.ori %18, %33 : vector<8x256xi1>
    %cst = arith.constant 0.000000e+00 : f32
    %cst_6 = arith.constant 1.000000e+00 : f32
    %35 = vector.broadcast %cst : f32 to vector<8x256xf32>
    %36 = vector.broadcast %cst_6 : f32 to vector<8x256xf32>
    %37 = arith.select %34, %35, %36 : vector<8x256xi1>, vector<8x256xf32>
    %c0_7 = arith.constant 0 : index
    %c0_8 = arith.constant 0 : index
    %c0_9 = arith.constant 0 : index
    %38 = vector.load %arg5[%c0_7, %c0_8, %c0_9] : memref<1x8x256xf32, #tpu.memory_space<vmem>>, vector<1x8x256xf32>
    %39 = vector.shape_cast %38 : vector<1x8x256xf32> to vector<8x256xf32>
    %40 = arith.mulf %39, %37 : vector<8x256xf32>
    %c0_10 = arith.constant 0 : index
    %c0_11 = arith.constant 0 : index
    %c0_12 = arith.constant 0 : index
    %41 = vector.load %arg6[%c0_10, %c0_11, %c0_12] : memref<1x8x256xf32, #tpu.memory_space<vmem>>, vector<1x8x256xf32>
    %42 = vector.shape_cast %41 : vector<1x8x256xf32> to vector<8x256xf32>
    %43 = vector.shape_cast %40 : vector<8x256xf32> to vector<1x8x256xf32>
    tpu.vector_store %arg6[%c0_10, %c0_11, %c0_12], %43 {strides = array<i32>} : memref<1x8x256xf32, #tpu.memory_space<vmem>>, vector<1x8x256xf32>,
    return
  }
  func.func @transform_0(%arg0: i32, %arg1: i32) -> (i32, i32) {
    %c0_i32 = arith.constant 0 : i32
    %c0_i32_0 = arith.constant 0 : i32
    return %c0_i32, %arg1 : i32, i32
  }
  func.func @transform_1(%arg0: i32, %arg1: i32) -> (i32, i32) {
    %c0_i32 = arith.constant 0 : i32
    %c0_i32_0 = arith.constant 0 : i32
    return %c0_i32, %arg1 : i32, i32
  }
  func.func @transform_2(%arg0: i32, %arg1: i32) -> (i32, i32, i32) {
    %c0_i32 = arith.constant 0 : i32
    %c0_i32_0 = arith.constant 0 : i32
    %c0_i32_1 = arith.constant 0 : i32
    return %arg0, %c0_i32, %c0_i32_0 : i32, i32, i32
  }
  func.func @transform_3(%arg0: i32, %arg1: i32) -> (i32, i32, i32) {
    %c0_i32 = arith.constant 0 : i32
    %c0_i32_0 = arith.constant 0 : i32
    return %arg0, %c0_i32, %arg1 : i32, i32, i32
  }
  func.func @transform_4(%arg0: i32, %arg1: i32) -> (i32, i32, i32) {
    %c0_i32 = arith.constant 0 : i32
    %c0_i32_0 = arith.constant 0 : i32
    return %arg0, %c0_i32, %arg1 : i32, i32, i32
  }
}

</mosaic_0001>

<llo_original>
// kernel: tpu_custom_call.1
$region0: #{tpu_custom_call.1}
  #allocation0 [shape = 'u32[]', space=smem, size = 0x4, offset = 0x4, fixed_abs, tag = 'smem constant byte address 0x4 - core index']
  #allocation1 [shape = 'u32[144,128]{1,0:T(1,128)}', space=vmem, size = 0x12000, scoped, tag = 'internal scratch']
  %s0 = inlined_call_operand.hbm [shape: s32[1,256], index: 0, kind: input, shape index: {}]
  %s1 = inlined_call_operand.vmem [shape: s32[1,256], index: 1, kind: input, shape index: {}]
  %s2 = inlined_call_operand.hbm [shape: s32[1,8,8], index: 2, kind: input, shape index: {}]
  %s3 = inlined_call_operand.hbm [shape: f32[1,8,256], index: 3, kind: input, shape index: {}]
  %s4 = inlined_call_operand.hbm [shape: f32[1,8,256], index: 4, kind: output, shape index: {}]
  %s5 = sld [smem:[#allocation0]]
  $region38: #{tpu_custom_call.1} parent=0
    _
  %s7 = ssub.s32 1, %s5
  %s8 = scalar_select 0, %s7, %s5
  $region1: #{tpu_custom_call.1} parent=0
    #allocation2 [shape = 'u8[1024]{0}', space=vmem, size = 0x400, scoped, tag = 'input window, operand 0, single buffered']
    #allocation3 [shape = 's32[1]{0}', space=sflag, size = 0x4, scoped, tag = 'scoped memory for tpu_custom_call.1']
    #allocation4 [shape = 's32[1]{0}', space=sflag, size = 0x4, scoped, tag = 'scoped memory for tpu_custom_call.1']
    #allocation5 [shape = 'u8[4096]{0}', space=vmem, size = 0x1000, scoped, tag = 'input window, operand 2, single buffered']
    #allocation6 [shape = 's32[1]{0}', space=sflag, size = 0x4, scoped, tag = 'scoped memory for tpu_custom_call.1']
    #allocation7 [shape = 'u8[8192]{0}', space=vmem, size = 0x2000, scoped, tag = 'input window, operand 3, single buffered']
    #allocation8 [shape = 'u8[8192]{0}', space=vmem, size = 0x2000, scoped, tag = 'output window, operand 0, single buffered']
    %9 = vsyncpa [#allocation3], 0
    %10 = vsyncpa [#allocation6], 0
    %11 = vsyncpa [#allocation4], 0
    // Predicated region
    $region2: #{tpu_custom_call.1} parent=1 // pred_check
      _
    $region3: #{tpu_custom_call.1} parent=1 // pred_check_branch
      %13 = sbr.rel (0) target = $region5
    $region4: #{tpu_custom_call.1} parent=1 // pred_region
      %s15 = ssub.s32 32, 32
      %16 = vsyncadd [#allocation3], %s15
      %s18 = sshll.u32 [#allocation2], 4
      %s19 = int_to_ptr.vmem [resolvable:$true] %s18
      %21 = dma.hbm_to_vmem [thread:$0]  %s0, 32, %s19, [#allocation3]
    $region5: #{tpu_custom_call.1} parent=1 // pred_fallthru
      _
    // Predicated region
    $region6: #{tpu_custom_call.1} parent=1 // pred_check
      _
    $region7: #{tpu_custom_call.1} parent=1 // pred_check_branch
      %23 = sbr.rel (0) target = $region9
    $region8: #{tpu_custom_call.1} parent=1 // pred_region
      _
    $region9: #{tpu_custom_call.1} parent=1 // pred_fallthru
      _
    // Predicated region
    $region10: #{tpu_custom_call.1} parent=1 // pred_check
      _
    $region11: #{tpu_custom_call.1} parent=1 // pred_check_branch
      %25 = sbr.rel (0) target = $region13
    $region12: #{tpu_custom_call.1} parent=1 // pred_region
      %s27 = ssub.s32 128, 128
      %28 = vsyncadd [#allocation6], %s27
      %s30 = sshll.u32 [#allocation5], 4
      %s31 = int_to_ptr.vmem [resolvable:$true] %s30
      %33 = dma.hbm_to_vmem [thread:$0]  %s2, 128, %s31, [#allocation6]
    $region13: #{tpu_custom_call.1} parent=1 // pred_fallthru
      _
    // Predicated region
    $region14: #{tpu_custom_call.1} parent=1 // pred_check
      _
    $region15: #{tpu_custom_call.1} parent=1 // pred_check_branch
      %35 = sbr.rel (0) target = $region17
    $region16: #{tpu_custom_call.1} parent=1 // pred_region
      %s37 = ssub.s32 256, 256
      %38 = vsyncadd [#allocation6], %s37
      %s40 = sshll.u32 [#allocation7], 4
      %s41 = int_to_ptr.vmem [resolvable:$true] %s40
      %43 = dma.hbm_to_vmem [thread:$0]  %s3, 256, %s41, [#allocation6]
    $region17: #{tpu_custom_call.1} parent=1 // pred_fallthru
      _
    // Predicated region
    $region18: #{tpu_custom_call.1} parent=1 // pred_check
      _
    $region19: #{tpu_custom_call.1} parent=1 // pred_check_branch
      %45 = sbr.rel (0) target = $region21
    $region20: #{tpu_custom_call.1} parent=1 // pred_region
      %46 = dma.done [#allocation3], 32
    $region21: #{tpu_custom_call.1} parent=1 // pred_fallthru
      _
    // Predicated region
    $region22: #{tpu_custom_call.1} parent=1 // pred_check
      _
    $region23: #{tpu_custom_call.1} parent=1 // pred_check_branch
      %48 = sbr.rel (0) target = $region25
    $region24: #{tpu_custom_call.1} parent=1 // pred_region
      %49 = dma.done [#allocation6], 128
    $region25: #{tpu_custom_call.1} parent=1 // pred_fallthru
      _
    // Predicated region
    $region26: #{tpu_custom_call.1} parent=1 // pred_check
      _
    $region27: #{tpu_custom_call.1} parent=1 // pred_check_branch
      %51 = sbr.rel (0) target = $region29
    $region28: #{tpu_custom_call.1} parent=1 // pred_region
      %52 = dma.done [#allocation6], 256
    $region29: #{tpu_custom_call.1} parent=1 // pred_fallthru
      _
    %v53 = vld [vmem:[#allocation2] sm:$0x3]
    %v54 = vld [vmem:[%s1] sm:$0x3]
    %v55 = vld [vmem:[#allocation5] sm:$0xff]
    %v56 = vlaneseq
    %v57 = vshrl.u32 %v56, 7
    %v58 = vsub.s32 0, %v57
    %v59 = vrot.slane %v53, %v58
    %v60 = vlaneseq
    %v61 = vshrl.u32 %v60, 7
    %v62 = vsub.s32 1, %v61
    %v63 = vrot.slane %v53, %v62
    %64 = vset.pattern.permute.xlu0 0
    %65 = vperm.xlu0 %64, %v55
    %v66 = vpop.permute.xlu0 %65
    %v67 = vsub.s32 %v59, %v66
    %v68 = vsub.s32 %v63, %v66
    %69 = vset.pattern.permute.xlu0 1
    %70 = vperm.xlu0 %69, %v55
    %v71 = vpop.permute.xlu0 %70
    %vm72 = vcmp.lt.u32.totalorder %v67, %v71
    %vm73 = vcmp.lt.u32.totalorder %v68, %v71
    %v74 = vlaneseq
    %v75 = vshrl.u32 %v74, 7
    %v76 = vsub.s32 0, %v75
    %v77 = vrot.slane %v54, %v76
    %v78 = vlaneseq
    %v79 = vshrl.u32 %v78, 7
    %v80 = vsub.s32 1, %v79
    %v81 = vrot.slane %v54, %v80
    %82 = vset.pattern.permute.xlu0 2
    %83 = vperm.xlu0 %82, %v55
    %v84 = vpop.permute.xlu0 %83
    %v85 = vsub.s32 %v77, %v84
    %v86 = vsub.s32 %v81, %v84
    %87 = vset.pattern.permute.xlu0 3
    %88 = vperm.xlu0 %87, %v55
    %v89 = vpop.permute.xlu0 %88
    %vm90 = vcmp.lt.u32.totalorder %v85, %v89
    %vm91 = vcmp.lt.u32.totalorder %v86, %v89
    %vm92 = vmand %vm72, %vm90
    %vm93 = vmand %vm73, %vm91
    %94 = vset.pattern.permute.xlu0 4
    %95 = vperm.xlu0 %94, %v55
    %v96 = vpop.permute.xlu0 %95
    %v97 = vsub.s32 %v59, %v96
    %v98 = vsub.s32 %v63, %v96
    %99 = vset.pattern.permute.xlu0 5
    %100 = vperm.xlu0 %99, %v55
    %v101 = vpop.permute.xlu0 %100
    %vm102 = vcmp.lt.u32.totalorder %v97, %v101
    %vm103 = vcmp.lt.u32.totalorder %v98, %v101
    %104 = vset.pattern.permute.xlu0 6
    %105 = vperm.xlu0 %104, %v55
    %v106 = vpop.permute.xlu0 %105
    %v107 = vsub.s32 %v77, %v106
    %v108 = vsub.s32 %v81, %v106
    %109 = vset.pattern.permute.xlu0 7
    %110 = vperm.xlu0 %109, %v55
    %v111 = vpop.permute.xlu0 %110
    %vm112 = vcmp.lt.u32.totalorder %v107, %v111
    %vm113 = vcmp.lt.u32.totalorder %v108, %v111
    %vm114 = vmand %vm102, %vm112
    %vm115 = vmand %vm103, %vm113
    %vm116 = vmor %vm92, %vm114
    %vm117 = vmor %vm93, %vm115
    %v118 = vsel %vm116, 0.0, 1.0
    %v119 = vsel %vm117, 0.0, 1.0
    %v120 = vld [vmem:[#allocation7] sm:$0xff]
    %v121 = vld [vmem:[#allocation7 + $0x8] sm:$0xff]
    %v122 = vmul.f32 %v120, %v118
    %v123 = vmul.f32 %v121, %v119
    %124 = vst [vmem:[#allocation8] sm:$0xff] %v122
    %125 = vst [vmem:[#allocation8 + $0x8] sm:$0xff] %v123
    // Predicated region
    $region30: #{tpu_custom_call.1} parent=1 // pred_check
      _
    $region31: #{tpu_custom_call.1} parent=1 // pred_check_branch
      %127 = sbr.rel (0) target = $region33
    $region32: #{tpu_custom_call.1} parent=1 // pred_region
      %s129 = ssub.s32 256, 256
      %130 = vsyncadd [#allocation4], %s129
      %s132 = sshll.u32 [#allocation8], 4
      %s133 = int_to_ptr.vmem [resolvable:$true] %s132
      %135 = dma.vmem_to_hbm [thread:$0]  %s133, 256, %s4, [#allocation4]
    $region33: #{tpu_custom_call.1} parent=1 // pred_fallthru
      _
    // Predicated region
    $region34: #{tpu_custom_call.1} parent=1 // pred_check
      _
    $region35: #{tpu_custom_call.1} parent=1 // pred_check_branch
      %137 = sbr.rel (0) target = $region37
    $region36: #{tpu_custom_call.1} parent=1 // pred_region
      %138 = dma.done [#allocation4], 256
    $region37: #{tpu_custom_call.1} parent=1 // pred_fallthru
      _
    %139 = vsyncpa [#allocation3], 1
    %140 = vsyncpa [#allocation6], 1
    %141 = vsyncpa [#allocation4], 1

</llo_original>
